<compile_context>
chip_gen: v7x
topology: tpu7x:2x2x1
jax: 0.10.0
libtpu: 0.0.40
codegen_flags: <defaults>
</compile_context>

<pallas_src>
import functools

import jax
import jax.numpy as jnp
import numpy as np
from jax.experimental import pallas as pl
from jax.experimental.pallas import tpu as pltpu


# ----------------------------------------------------------------------------
# Fused kernel: pointwise model (conv1x1x1 + bias + ReLU) + collapsed TTA agg
# ----------------------------------------------------------------------------
def _fused_tta_kernel(w_ref, b_ref, x_ref, o_ref, *, num_ttas, agg_mode):
    """One grid step = (sample n, spatial block i).

    w_ref : (C_out, C_in) f32, SMEM scalars
    b_ref : (C_out,)      f32, SMEM scalars
    x_ref : (C_in, rows, lanes)  VMEM input tile
    o_ref : (C_out, rows, lanes) VMEM output tile

    The TTA axis is collapsed: flip -> pointwise model -> unflip equals the
    pointwise model, so the T per-TTA heatmaps are bit-identical and the
    aggregation is a cheap epilogue on a single h.  A (1,4) contraction is
    degenerate, so the model runs as VPU FMAs (no MXU) with full (8,128)
    vreg packing on loads/stores.
    """
    cin = x_ref.shape[0]
    cout = o_ref.shape[0]

    for o in range(cout):
        h = x_ref[0].astype(jnp.float32) * w_ref[o, 0]
        for c in range(1, cin):
            h = h + x_ref[c].astype(jnp.float32) * w_ref[o, c]
        h = jnp.maximum(h + b_ref[o], 0.0)

        if agg_mode == "avg" and num_ttas > 1:
            # Literal sequential sum of the T (identical) heatmaps, then the
            # divide -- matches the PyTorch aggregation order; a few extra VPU
            # adds fully hidden under the HBM-bound DMA.
            agg = h
            for _ in range(num_ttas - 1):
                agg = agg + h
            agg = agg * (1.0 / num_ttas)
        else:
            # 'max' over identical tensors (or a single TTA) is the identity.
            agg = h

        o_ref[o] = agg.astype(o_ref.dtype)


# ----------------------------------------------------------------------------
# Tiling: flat spatial size -> (rows, lanes) with sublane-dense row tiles
# ----------------------------------------------------------------------------
def _choose_tiling(S_pad, sub, max_tile_elems, batch):
    """S_pad is a multiple of sub*128.  Returns (lanes, row_tile, rows_total).

    Preference order (per review): keep rows >= sub and a multiple of sub
    FIRST, then maximize lane width; lanes=128 is always a legal fallback.
    """
    lanes = 128
    for cand in (1024, 512, 256, 128):
        if S_pad % cand == 0:
            rows = S_pad // cand
            if rows >= sub and rows % sub == 0:
                lanes = cand
                break
    rows_total = S_pad // lanes

    max_rows = max(sub, (max_tile_elems // lanes) // sub * sub)
    row_tile = sub
    d = (min(rows_total, max_rows) // sub) * sub
    while d >= sub:
        if rows_total % d == 0:
            row_tile = d
            break
        d -= sub

    # v7x has 2 TensorCores sharding the "parallel" grid axes: make sure there
    # are at least 2 parallel grid units when the batch alone doesn't give it.
    if batch * (rows_total // row_tile) < 2:
        half = row_tile // 2
        if half >= sub and half % sub == 0 and rows_total % half == 0:
            row_tile = half

    return lanes, row_tile, rows_total


# ----------------------------------------------------------------------------
# Forward: one fused pallas_call over (N, spatial blocks)
# ----------------------------------------------------------------------------
@functools.partial(jax.jit, static_argnames=("num_ttas", "agg_mode", "max_tile_elems"))
def tta_pointwise_forward(x, weight, bias, *, num_ttas, agg_mode,
                          max_tile_elems=524288):
    """x: (N, C_in, D, H, W) -> aggregated heatmap (N, C_out, D, H, W)."""
    N, Cin, D, H, W = x.shape
    Cout = weight.shape[0]
    S = D * H * W

    itemsize = jnp.dtype(x.dtype).itemsize
    sub = 8 if itemsize >= 4 else 32 // itemsize          # (8,128) f32, (16,128) bf16
    pad_unit = sub * 128
    S_pad = ((S + pad_unit - 1) // pad_unit) * pad_unit

    # Cap per-channel tile elements so the double-buffered in+out footprint
    # stays around ~32 MiB (safe on v5e/v6e and under v7x's 64 MiB physical).
    per_elem_bytes = 2 * (Cin + Cout) * itemsize
    max_tile_elems = int(min(max_tile_elems,
                             max(pad_unit, (32 << 20) // per_elem_bytes)))

    lanes, row_tile, rows_total = _choose_tiling(S_pad, sub, max_tile_elems, N)

    # Free reshapes (contiguous trailing dims); pad only for odd volumes.
    x_flat = x.reshape(N, Cin, S)
    if S_pad != S:
        # TODO(synk): lane padding for odd D*H*W costs one extra XLA pad copy;
        # a masked-store kernel path would avoid it.
        x_flat = jnp.pad(x_flat, ((0, 0), (0, 0), (0, S_pad - S)))
    x4 = x_flat.reshape(N, Cin, rows_total, lanes)

    kernel = functools.partial(_fused_tta_kernel,
                               num_ttas=num_ttas, agg_mode=agg_mode)

    in_tile_bytes = Cin * row_tile * lanes * itemsize
    out_tile_bytes = Cout * row_tile * lanes * itemsize
    vmem_limit = int(min(40 << 20,
                         max(32 << 20, 2 * (in_tile_bytes + out_tile_bytes) + (4 << 20))))

    out4 = pl.pallas_call(
        kernel,
        out_shape=jax.ShapeDtypeStruct((N, Cout, rows_total, lanes), x.dtype),
        grid_spec=pltpu.PrefetchScalarGridSpec(
            num_scalar_prefetch=0,
            grid=(N, rows_total // row_tile),
            in_specs=[
                # tiny weight / bias as SMEM scalars (no MXU, no VMEM blocks)
                pl.BlockSpec(memory_space=pltpu.MemorySpace.SMEM),
                pl.BlockSpec(memory_space=pltpu.MemorySpace.SMEM),
                # lane/sublane-dense input tile, read from HBM exactly once
                pl.BlockSpec((None, Cin, row_tile, lanes),
                             lambda n, i: (n, 0, i, 0)),
            ],
            # aggregated heatmap written to HBM exactly once
            out_specs=pl.BlockSpec((None, Cout, row_tile, lanes),
                                   lambda n, i: (n, 0, i, 0)),
        ),
        compiler_params=pltpu.CompilerParams(
            dimension_semantics=("parallel", "parallel"),
            vmem_limit_bytes=vmem_limit),
    )(weight, bias, x4)

    out_flat = out4.reshape(N, Cout, S_pad)
    if S_pad != S:
        out_flat = out_flat[:, :, :S]
    return out_flat.reshape(N, Cout, D, H, W)


# ----------------------------------------------------------------------------
# TTA wrapper (JAX/Pallas equivalent of TTAModelWrapper._forward_fast)
# ----------------------------------------------------------------------------
_TTA_AXES = {          # ori_dims='zyx'  ->  volume axes (D, H, W) = (2, 3, 4)
    "none": (),
    "flip_z": (2,),
    "flip_y": (3,),
    "flip_x": (4,),
}


class TTAModelWrapperPallas:
    def __init__(self, weight, bias, tta_names, heatmap_agg_mode="avg"):
        assert heatmap_agg_mode in ("avg", "max")
        assert len(tta_names) == len(set(tta_names))
        # GUARD: the kernel folds flip -> model -> unflip away.  That is exact
        # ONLY for involutive spatial flips around a pointwise (1x1x1 conv)
        # model.  Refuse anything else instead of silently being wrong.
        unknown = set(tta_names) - set(_TTA_AXES)
        if unknown:
            raise NotImplementedError(
                f"unsupported TTA transforms for the fused pointwise kernel: {unknown}")
        assert weight.ndim == 2, "model must be a pointwise (C_out, C_in) conv"
        self.weight = weight
        self.bias = bias
        self.tta_names = list(tta_names)
        self.tta_axes = [_TTA_AXES[n] for n in tta_names]
        self.heatmap_agg_mode = heatmap_agg_mode
        self.num_ttas = len(tta_names)

    def __call__(self, x):
        return tta_pointwise_forward(
            x, self.weight, self.bias,
            num_ttas=self.num_ttas, agg_mode=self.heatmap_agg_mode)


# ----------------------------------------------------------------------------
# Plain-JAX reference: the FULL flip -> model -> unflip -> aggregate pipeline
# (validates that collapsing the TTA axis inside the kernel is exact here).
# ----------------------------------------------------------------------------
def _reference(x, weight, bias, tta_axes, mode):
    def model(v):
        h = jnp.einsum("oc,ncdhw->nodhw", weight, v) + bias.reshape(1, -1, 1, 1, 1)
        return jnp.maximum(h, 0.0)

    hs = []
    for axes in tta_axes:
        tx = jnp.flip(x, axis=axes) if axes else x
        h = model(tx)
        hs.append(jnp.flip(h, axis=axes) if axes else h)
    agg = hs[0]
    for i in range(1, len(hs)):
        if mode == "avg":
            agg = agg + hs[i]
        else:
            agg = jnp.maximum(agg, hs[i])
    if mode == "avg" and len(hs) > 1:
        agg = agg / float(len(hs))
    return agg


if __name__ == "__main__":
    key = jax.random.PRNGKey(0)
    k_x, k_w, k_b = jax.random.split(key, 3)

    # Small 3D volume in NCDHW: batch=2, channels=4, D=H=W=16
    N, Cin, D, H, W = 2, 4, 16, 16, 16
    Cout = 1
    x = jax.random.normal(k_x, (N, Cin, D, H, W), dtype=jnp.float32)

    # Deterministic synthetic model params (1x1x1 Conv3d: Cin -> Cout)
    weight = jax.random.normal(k_w, (Cout, Cin), dtype=jnp.float32) * 0.5
    bias = jax.random.normal(k_b, (Cout,), dtype=jnp.float32) * 0.1

    tta_names = ["none", "flip_z", "flip_y", "flip_x"]

    for mode in ("avg", "max"):
        wrapper = TTAModelWrapperPallas(weight, bias, tta_names, heatmap_agg_mode=mode)
        out = jax.block_until_ready(wrapper(x))
        ref = _reference(x, weight, bias, wrapper.tta_axes, mode)
        np.testing.assert_allclose(np.asarray(out), np.asarray(ref),
                                   rtol=1e-5, atol=1e-5)

    print("KERNEL_OK")
</pallas_src>

<mosaic_0001>
module attributes {stable_mosaic.version = 11 : i64} {
  func.func @_fused_tta_kernel(%arg0: i32, %arg1: i32, %arg2: memref<1x4xf32, #tpu.memory_space<smem>>, %arg3: memref<1xf32, #tpu.memory_space<smem>>, %arg4: memref<1x4x8x512xf32, #tpu.memory_space<vmem>>, %arg5: memref<1x1x8x512xf32, #tpu.memory_space<vmem>>) attributes {dimension_semantics = [#tpu.dimension_semantics<parallel>, #tpu.dimension_semantics<parallel>], iteration_bounds = array<i64: 2, 1>, scalar_prefetch = 0 : i64, scratch_operands = 0 : i64, tpu.core_type = #tpu.core_type<tc>, window_params = [{transform_indices = @transform_0, window_bounds = array<i64: 1, 4>}, {transform_indices = @transform_1, window_bounds = array<i64: 1>}, {transform_indices = @transform_2, window_bounds = array<i64: 1, 4, 8, 512>}, {transform_indices = @transform_3, window_bounds = array<i64: 1, 1, 8, 512>}]} {
    %c0 = arith.constant 0 : index
    %c0_0 = arith.constant 0 : index
    %c0_1 = arith.constant 0 : index
    %c0_2 = arith.constant 0 : index
    %0 = vector.load %arg4[%c0, %c0_0, %c0_1, %c0_2] : memref<1x4x8x512xf32, #tpu.memory_space<vmem>>, vector<1x1x8x512xf32>
    %1 = vector.shape_cast %0 : vector<1x1x8x512xf32> to vector<8x512xf32>
    %c0_3 = arith.constant 0 : index
    %c0_4 = arith.constant 0 : index
    %2 = memref.load %arg2[%c0_3, %c0_4] : memref<1x4xf32, #tpu.memory_space<smem>>
    %3 = vector.broadcast %2 : f32 to vector<8x512xf32>
    %4 = arith.mulf %1, %3 : vector<8x512xf32>
    %c0_5 = arith.constant 0 : index
    %c1 = arith.constant 1 : index
    %c0_6 = arith.constant 0 : index
    %c0_7 = arith.constant 0 : index
    %5 = vector.load %arg4[%c0_5, %c1, %c0_6, %c0_7] : memref<1x4x8x512xf32, #tpu.memory_space<vmem>>, vector<1x1x8x512xf32>
    %6 = vector.shape_cast %5 : vector<1x1x8x512xf32> to vector<8x512xf32>
    %c0_8 = arith.constant 0 : index
    %c1_9 = arith.constant 1 : index
    %7 = memref.load %arg2[%c0_8, %c1_9] : memref<1x4xf32, #tpu.memory_space<smem>>
    %8 = vector.broadcast %7 : f32 to vector<8x512xf32>
    %9 = arith.mulf %6, %8 : vector<8x512xf32>
    %10 = arith.addf %4, %9 : vector<8x512xf32>
    %c0_10 = arith.constant 0 : index
    %c2 = arith.constant 2 : index
    %c0_11 = arith.constant 0 : index
    %c0_12 = arith.constant 0 : index
    %11 = vector.load %arg4[%c0_10, %c2, %c0_11, %c0_12] : memref<1x4x8x512xf32, #tpu.memory_space<vmem>>, vector<1x1x8x512xf32>
    %12 = vector.shape_cast %11 : vector<1x1x8x512xf32> to vector<8x512xf32>
    %c0_13 = arith.constant 0 : index
    %c2_14 = arith.constant 2 : index
    %13 = memref.load %arg2[%c0_13, %c2_14] : memref<1x4xf32, #tpu.memory_space<smem>>
    %14 = vector.broadcast %13 : f32 to vector<8x512xf32>
    %15 = arith.mulf %12, %14 : vector<8x512xf32>
    %16 = arith.addf %10, %15 : vector<8x512xf32>
    %c0_15 = arith.constant 0 : index
    %c3 = arith.constant 3 : index
    %c0_16 = arith.constant 0 : index
    %c0_17 = arith.constant 0 : index
    %17 = vector.load %arg4[%c0_15, %c3, %c0_16, %c0_17] : memref<1x4x8x512xf32, #tpu.memory_space<vmem>>, vector<1x1x8x512xf32>
    %18 = vector.shape_cast %17 : vector<1x1x8x512xf32> to vector<8x512xf32>
    %c0_18 = arith.constant 0 : index
    %c3_19 = arith.constant 3 : index
    %19 = memref.load %arg2[%c0_18, %c3_19] : memref<1x4xf32, #tpu.memory_space<smem>>
    %20 = vector.broadcast %19 : f32 to vector<8x512xf32>
    %21 = arith.mulf %18, %20 : vector<8x512xf32>
    %22 = arith.addf %16, %21 : vector<8x512xf32>
    %c0_20 = arith.constant 0 : index
    %23 = memref.load %arg3[%c0_20] : memref<1xf32, #tpu.memory_space<smem>>
    %24 = vector.broadcast %23 : f32 to vector<8x512xf32>
    %25 = arith.addf %22, %24 : vector<8x512xf32>
    %cst = arith.constant 0.000000e+00 : f32
    %26 = vector.broadcast %cst : f32 to vector<8x512xf32>
    %27 = arith.maximumf %25, %26 : vector<8x512xf32>
    %28 = arith.addf %27, %27 : vector<8x512xf32>
    %29 = arith.addf %28, %27 : vector<8x512xf32>
    %30 = arith.addf %29, %27 : vector<8x512xf32>
    %cst_21 = arith.constant 2.500000e-01 : f32
    %31 = vector.broadcast %cst_21 : f32 to vector<8x512xf32>
    %32 = arith.mulf %30, %31 : vector<8x512xf32>
    %c0_22 = arith.constant 0 : index
    %c0_23 = arith.constant 0 : index
    %c0_24 = arith.constant 0 : index
    %c0_25 = arith.constant 0 : index
    %33 = vector.load %arg5[%c0_22, %c0_23, %c0_24, %c0_25] : memref<1x1x8x512xf32, #tpu.memory_space<vmem>>, vector<1x1x8x512xf32>
    %34 = vector.shape_cast %33 : vector<1x1x8x512xf32> to vector<8x512xf32>
    %35 = vector.shape_cast %32 : vector<8x512xf32> to vector<1x1x8x512xf32>
    tpu.vector_store %arg5[%c0_22, %c0_23, %c0_24, %c0_25], %35 {strides = array<i32>} : memref<1x1x8x512xf32, #tpu.memory_space<vmem>>, vector<1x1x8x512xf32>,
    return
  }
  func.func @transform_0(%arg0: i32, %arg1: i32) -> (i32, i32) {
    %c0_i32 = arith.constant 0 : i32
    %c0_i32_0 = arith.constant 0 : i32
    %c0_i32_1 = arith.constant 0 : i32
    return %c0_i32, %c0_i32_0 : i32, i32
  }
  func.func @transform_1(%arg0: i32, %arg1: i32) -> i32 {
    %c0_i32 = arith.constant 0 : i32
    %c0_i32_0 = arith.constant 0 : i32
    return %c0_i32 : i32
  }
  func.func @transform_2(%arg0: i32, %arg1: i32) -> (i32, i32, i32, i32) {
    %c0_i32 = arith.constant 0 : i32
    %c0_i32_0 = arith.constant 0 : i32
    %c0_i32_1 = arith.constant 0 : i32
    return %arg0, %c0_i32, %arg1, %c0_i32_0 : i32, i32, i32, i32
  }
  func.func @transform_3(%arg0: i32, %arg1: i32) -> (i32, i32, i32, i32) {
    %c0_i32 = arith.constant 0 : i32
    %c0_i32_0 = arith.constant 0 : i32
    %c0_i32_1 = arith.constant 0 : i32
    return %arg0, %c0_i32, %arg1, %c0_i32_0 : i32, i32, i32, i32
  }
}

</mosaic_0001>

<llo_original>
// kernel: tta_pointwise_forward.1
$region0: #{tta_pointwise_forward.1}
  #allocation0 [shape = 'u32[]', space=smem, size = 0x4, offset = 0x4, fixed_abs, tag = 'smem constant byte address 0x4 - core index']
  #allocation1 [shape = 'u32[144,128]{1,0:T(1,128)}', space=vmem, size = 0x12000, scoped, tag = 'internal scratch']
  #allocation2 [shape = 'f32[1]{0:T(128)S(6)}', space=smem, size = 0x200, scoped, tag = 'scoped memory for tta_pointwise_forward.1']
  %s0 = inlined_call_operand.vmem [shape: f32[1,4], index: 0, kind: input, shape index: {}]
  %s1 = inlined_call_operand.<no memory space> [shape: f32[1], index: 1, kind: input, shape index: {}]
  %s2 = inlined_call_operand.vmem [shape: f32[2,4,8,512], index: 2, kind: input, shape index: {}]
  %s3 = inlined_call_operand.vmem [shape: f32[2,1,8,512], index: 3, kind: output, shape index: {}]
  %s4 = sld [smem:[#allocation0]]
  $region49: #{tta_pointwise_forward.1} parent=0
    _
  %s6 = ssub.s32 1, %s4
  %s7 = scalar_select 0, %s6, %s4
  %8 = sst [smem:[#allocation2]] %s1
  $region1: #{tta_pointwise_forward.1} parent=0
    #allocation3 [shape = 'u8[512]{0}', space=smem, size = 0x200, scoped, tag = 'input window, operand 0, single buffered']
    #allocation4 [shape = 's32[2]{0}', space=sflag, size = 0x8, scoped, tag = 'scoped memory for tta_pointwise_forward.1']
    %9 = vsyncpa [#allocation4], 0
    loop: start=0, step=1, limit=4
    $region2: #{tta_pointwise_forward.1} parent=1 // loop_pre_header
      _
    $region3: #{tta_pointwise_forward.1} parent=1 // loop_header
      %s11 = sphi 0, %s15
      %p12 = scmp.ge.s32.totalorder %s11, 4
      %s18 = sphi 0, %s30
      %s19 = sphi 0, %s26
      %s20 = sphi 0, %s18
      %s21 = sphi 0, %s19
      %s22 = sphi 0, %s20
      %s23 = sphi 0, %s21
      %s31 = sphi 0, %s31
      %s33 = sphi 0, %s31
      %s34 = sphi 0, %s33
      %s48 = sphi 0, %s34
      %s52 = sphi 0, %s52
      %s54 = sphi 0, %s52
      %s55 = sphi 0, %s54
      %s69 = sphi 0, %s55
      %s77 = sphi 0, %s79
      %s80 = sphi 0, %s77
      %s81 = sphi 0, %s80
      %s97 = sphi 0, %s81
      %s105 = sphi 0, %s107
      %s108 = sphi 0, %s105
      %s109 = sphi 0, %s108
      %s125 = sphi 0, %s109
    $region4: #{tta_pointwise_forward.1} parent=1 // loop_header_branch
      %14 = sbr.rel (%p12) target = $region8
    $region5: #{tta_pointwise_forward.1} parent=1 // loop_body
      %s16 = ssub.s32 %s11, 1
      %s17 = ssub.s32 %s11, 2
      %s24 = sadd.s32 1, %s19
      %p25 = scmp.ge.s32.totalorder %s24, 1
      %s26 = scalar_select %p25, 0, %s24
      %s27 = sadd.s32 1, %s18
      %s28 = scalar_select %p25, %s27, %s18
      %p29 = scmp.ge.s32.totalorder %s28, 2
      %s30 = scalar_select %p29, 0, %s28
      %s32 = sadd.s32 %s31, 1
      %p35 = scmp.eq.s32.totalorder %s11, 1
      %p36 = scmp.ne.s32.totalorder %s31, %s33
      %p37 = scmp.eq.s32.totalorder %s11, 0
      %p38 = por %p36, %p37
      %p39 = scmp.ne.s32.totalorder %s31, %s33
      %p40 = scmp.eq.s32.totalorder %s16, 1
      %p41 = por %p39, %p40
      %p42 = scmp.ne.s32.totalorder %s33, %s34
      %p43 = scmp.eq.s32.totalorder %s16, 0
      %p44 = por %p42, %p43
      %p45 = scmp.ne.s32.totalorder %s33, %s34
      %p46 = scmp.eq.s32.totalorder %s17, 1
      %p47 = por %p45, %p46
      %p49 = scmp.ne.s32.totalorder %s34, %s48
      %p50 = scmp.eq.s32.totalorder %s17, 0
      %p51 = por %p49, %p50
      %s53 = sadd.s32 %s52, 1
      %p56 = scmp.eq.s32.totalorder %s11, 1
      %p57 = scmp.ne.s32.totalorder %s52, %s54
      %p58 = scmp.eq.s32.totalorder %s11, 0
      %p59 = por %p57, %p58
      %p60 = scmp.ne.s32.totalorder %s52, %s54
      %p61 = scmp.eq.s32.totalorder %s16, 1
      %p62 = por %p60, %p61
      %p63 = scmp.ne.s32.totalorder %s54, %s55
      %p64 = scmp.eq.s32.totalorder %s16, 0
      %p65 = por %p63, %p64
      %p66 = scmp.ne.s32.totalorder %s54, %s55
      %p67 = scmp.eq.s32.totalorder %s17, 1
      %p68 = por %p66, %p67
      %p70 = scmp.ne.s32.totalorder %s55, %s69
      %p71 = scmp.eq.s32.totalorder %s17, 0
      %p72 = por %p70, %p71
      %s73 = ssub.s32 %s18, %s30
      %s74 = ssub.s32 %s19, %s26
      %s75 = sor.u32 %s73, %s74
      %p76 = scmp.eq.s32.totalorder %s75, 0
      %s78 = sadd.s32 %s77, 1
      %s79 = scalar_select %p76, %s77, %s78
      %p82 = pneg %p76
      %p83 = scmp.eq.s32.totalorder %s11, 1
      %p84 = por %p82, %p83
      %p85 = scmp.ne.s32.totalorder %s77, %s80
      %p86 = scmp.eq.s32.totalorder %s11, 0
      %p87 = por %p85, %p86
      %p88 = scmp.ne.s32.totalorder %s77, %s80
      %p89 = scmp.eq.s32.totalorder %s16, 1
      %p90 = por %p88, %p89
      %p91 = scmp.ne.s32.totalorder %s80, %s81
      %p92 = scmp.eq.s32.totalorder %s16, 0
      %p93 = por %p91, %p92
      %p94 = scmp.ne.s32.totalorder %s80, %s81
      %p95 = scmp.eq.s32.totalorder %s17, 1
      %p96 = por %p94, %p95
      %p98 = scmp.ne.s32.totalorder %s81, %s97
      %p99 = scmp.eq.s32.totalorder %s17, 0
      %p100 = por %p98, %p99
      %s101 = ssub.s32 %s18, %s30
      %s102 = ssub.s32 %s19, %s26
      %s103 = sor.u32 %s101, %s102
      %p104 = scmp.eq.s32.totalorder %s103, 0
      %s106 = sadd.s32 %s105, 1
      %s107 = scalar_select %p104, %s105, %s106
      %p110 = pneg %p104
      %p111 = scmp.eq.s32.totalorder %s11, 1
      %p112 = por %p110, %p111
      %p113 = scmp.ne.s32.totalorder %s105, %s108
      %p114 = scmp.eq.s32.totalorder %s11, 0
      %p115 = por %p113, %p114
      %p116 = scmp.ne.s32.totalorder %s105, %s108
      %p117 = scmp.eq.s32.totalorder %s16, 1
      %p118 = por %p116, %p117
      %p119 = scmp.ne.s32.totalorder %s108, %s109
      %p120 = scmp.eq.s32.totalorder %s16, 0
      %p121 = por %p119, %p120
      %p122 = scmp.ne.s32.totalorder %s108, %s109
      %p123 = scmp.eq.s32.totalorder %s17, 1
      %p124 = por %p122, %p123
      %p126 = scmp.ne.s32.totalorder %s109, %s125
      %p127 = scmp.eq.s32.totalorder %s17, 0
      %p128 = por %p126, %p127
      %p129 = scmp.le.s32.totalorder 1, %s11
      %p130 = scmp.lt.s32.totalorder %s11, 3
      %p131 = pnand %p129, %p130
      %p132 = pneg %p131
      // Predicated region
      $region9: #{tta_pointwise_forward.1} parent=5 // pred_check
        _
      $region10: #{tta_pointwise_forward.1} parent=5 // pred_check_branch
        %134 = sbr.rel (%p131) target = $region12
      $region11: #{tta_pointwise_forward.1} parent=5 // pred_region
        %s135 = ssub.s32 %s11, 1
        // Predicated region
        $region13: #{tta_pointwise_forward.1} parent=11 // pred_check
          %p136 = pneg %p44
        $region14: #{tta_pointwise_forward.1} parent=11 // pred_check_branch
          %138 = sbr.rel (%p136) target = $region16
        $region15: #{tta_pointwise_forward.1} parent=11 // pred_region
          %s140 = ssub.s32 16, 16
          %141 = vsyncadd [#allocation4], %s140
          %s143 = sshll.u32 %s0, 4
          %s144 = int_to_ptr.vmem [resolvable:$true] %s143
          %146 = dma.vmem_to_smem %s144, 16, [#allocation3], [#allocation4]
        $region16: #{tta_pointwise_forward.1} parent=11 // pred_fallthru
          _
        // Predicated region
        $region17: #{tta_pointwise_forward.1} parent=11 // pred_check
          %p147 = pneg %p65
        $region18: #{tta_pointwise_forward.1} parent=11 // pred_check_branch
          %149 = sbr.rel (%p147) target = $region20
        $region19: #{tta_pointwise_forward.1} parent=11 // pred_region
          _
        $region20: #{tta_pointwise_forward.1} parent=11 // pred_fallthru
          _
      $region12: #{tta_pointwise_forward.1} parent=5 // pred_fallthru
        _
      %p150 = scmp.lt.s32.totalorder %s11, 2
      // Predicated region
      $region21: #{tta_pointwise_forward.1} parent=5 // pred_check
        %p151 = pneg %p150
      $region22: #{tta_pointwise_forward.1} parent=5 // pred_check_branch
        %153 = sbr.rel (%p151) target = $region24
      $region23: #{tta_pointwise_forward.1} parent=5 // pred_region
        // Predicated region
        $region25: #{tta_pointwise_forward.1} parent=23 // pred_check
          %p154 = pneg %p87
        $region26: #{tta_pointwise_forward.1} parent=23 // pred_check_branch
          %156 = sbr.rel (%p154) target = $region28
        $region27: #{tta_pointwise_forward.1} parent=23 // pred_region
          %p157 = scmp.lt.s32.totalorder %s18, 1
          %s158 = scalar_select %p157, %s18, 1
          %p159 = scmp.lt.s32.totalorder %s19, 0
          %s160 = scalar_select %p159, %s19, 0
          %s161 = smul.addr %s160, 4
          %s162 = smul.addr %s158, 16
          %s163 = sadd.s32 %s161, %s162
          %s164 = smul.addr %s163, 8
          %s165 = scalar_lea.vmem %s2, %s164
        $region28: #{tta_pointwise_forward.1} parent=23 // pred_fallthru
          _
      $region24: #{tta_pointwise_forward.1} parent=5 // pred_fallthru
        _
      %p166 = scmp.le.s32.totalorder 1, %s11
      %p167 = scmp.lt.s32.totalorder %s11, 3
      %p168 = pnand %p166, %p167
      %p169 = pneg %p168
      // Predicated region
      $region29: #{tta_pointwise_forward.1} parent=5 // pred_check
        _
      $region30: #{tta_pointwise_forward.1} parent=5 // pred_check_branch
        %171 = sbr.rel (%p168) target = $region32
      $region31: #{tta_pointwise_forward.1} parent=5 // pred_region
        %s172 = ssub.s32 %s11, 1
        // Predicated region
        $region33: #{tta_pointwise_forward.1} parent=31 // pred_check
          %p173 = pneg %p44
        $region34: #{tta_pointwise_forward.1} parent=31 // pred_check_branch
          %175 = sbr.rel (%p173) target = $region36
        $region35: #{tta_pointwise_forward.1} parent=31 // pred_region
          %176 = dma.done [#allocation4], 16
        $region36: #{tta_pointwise_forward.1} parent=31 // pred_fallthru
          _
        %177 = sfence
        %p178 = pneg %p44
        %p179 = pneg %p41
        %p180 = pneg %p65
        %p181 = pneg %p62
        %p182 = scmp.lt.s32.totalorder %s20, 1
        %s183 = scalar_select %p182, %s20, 1
        %p184 = scmp.lt.s32.totalorder %s21, 0
        %s185 = scalar_select %p184, %s21, 0
        %s186 = smul.addr %s185, 4
        %s187 = smul.addr %s183, 16
        %s188 = sadd.s32 %s186, %s187
        %s189 = smul.addr %s188, 8
        %s190 = scalar_lea.vmem %s2, %s189
        %p191 = pneg %p93
        %p192 = pneg %p90
        %p193 = pneg %p121
        %p194 = pneg %p118
        %p195 = scmp.lt.s32.totalorder %s20, 1
        %s196 = scalar_select %p195, %s20, 1
        %p197 = scmp.lt.s32.totalorder %s21, 0
        %s198 = scalar_select %p197, %s21, 0
        %s199 = smul.addr %s198, 4
        %s200 = smul.addr %s196, 4
        %s201 = sadd.s32 %s199, %s200
        %s202 = smul.addr %s201, 8
        %s203 = scalar_lea.vmem %s3, %s202
        %p204 = scmp.lt.s32.totalorder %s20, 1
        %s205 = scalar_select %p204, %s20, 1
        %p206 = scmp.lt.s32.totalorder %s21, 0
        %s207 = scalar_select %p206, %s21, 0
        %s208 = smul.addr %s207, 4
        %s209 = smul.addr %s205, 16
        %s210 = sadd.s32 %s208, %s209
        %s211 = smul.addr %s210, 8
        %s212 = scalar_lea.vmem %s2, %s211
        %p213 = scmp.lt.s32.totalorder %s20, 1
        %s214 = scalar_select %p213, %s20, 1
        %p215 = scmp.lt.s32.totalorder %s21, 0
        %s216 = scalar_select %p215, %s21, 0
        %s217 = smul.addr %s216, 4
        %s218 = smul.addr %s214, 4
        %s219 = sadd.s32 %s217, %s218
        %s220 = smul.addr %s219, 8
        %s221 = scalar_lea.vmem %s3, %s220
        %v222 = vld [vmem:[%s212] sm:$0xff]
        %v223 = vld [vmem:[%s212 + $0x8] sm:$0xff]
        %v224 = vld [vmem:[%s212 + $0x10] sm:$0xff]
        %v225 = vld [vmem:[%s212 + $0x18] sm:$0xff]
        %s226 = sld [smem:[#allocation3]]
        %v227 = vstv %s226
        %v228 = vmul.f32 %v222, %v227
        %v229 = vmul.f32 %v223, %v227
        %v230 = vmul.f32 %v224, %v227
        %v231 = vmul.f32 %v225, %v227
        %s232 = scalar_lea.vmem %s212, 32
        %v233 = vld [vmem:[%s232] sm:$0xff]
        %v234 = vld [vmem:[%s232 + $0x8] sm:$0xff]
        %v235 = vld [vmem:[%s232 + $0x10] sm:$0xff]
        %v236 = vld [vmem:[%s232 + $0x18] sm:$0xff]
        %s237 = sld [smem:[#allocation3 + $0x1]]
        %v238 = vstv %s237
        %v239 = vmul.f32 %v233, %v238
        %v240 = vmul.f32 %v234, %v238
        %v241 = vmul.f32 %v235, %v238
        %v242 = vmul.f32 %v236, %v238
        %v243 = vadd.f32 %v228, %v239
        %v244 = vadd.f32 %v229, %v240
        %v245 = vadd.f32 %v230, %v241
        %v246 = vadd.f32 %v231, %v242
        %s247 = scalar_lea.vmem %s212, 64
        %v248 = vld [vmem:[%s247] sm:$0xff]
        %v249 = vld [vmem:[%s247 + $0x8] sm:$0xff]
        %v250 = vld [vmem:[%s247 + $0x10] sm:$0xff]
        %v251 = vld [vmem:[%s247 + $0x18] sm:$0xff]
        %s252 = sld [smem:[#allocation3 + $0x2]]
        %v253 = vstv %s252
        %v254 = vmul.f32 %v248, %v253
        %v255 = vmul.f32 %v249, %v253
        %v256 = vmul.f32 %v250, %v253
        %v257 = vmul.f32 %v251, %v253
        %v258 = vadd.f32 %v243, %v254
        %v259 = vadd.f32 %v244, %v255
        %v260 = vadd.f32 %v245, %v256
        %v261 = vadd.f32 %v246, %v257
        %s262 = scalar_lea.vmem %s212, 96
        %v263 = vld [vmem:[%s262] sm:$0xff]
        %v264 = vld [vmem:[%s262 + $0x8] sm:$0xff]
        %v265 = vld [vmem:[%s262 + $0x10] sm:$0xff]
        %v266 = vld [vmem:[%s262 + $0x18] sm:$0xff]
        %s267 = sld [smem:[#allocation3 + $0x3]]
        %v268 = vstv %s267
        %v269 = vmul.f32 %v263, %v268
        %v270 = vmul.f32 %v264, %v268
        %v271 = vmul.f32 %v265, %v268
        %v272 = vmul.f32 %v266, %v268
        %v273 = vadd.f32 %v258, %v269
        %v274 = vadd.f32 %v259, %v270
        %v275 = vadd.f32 %v260, %v271
        %v276 = vadd.f32 %v261, %v272
        %s277 = sld [smem:[#allocation2]]
        %v278 = vstv %s277
        %v279 = vadd.f32 %v273, %v278
        %v280 = vadd.f32 %v274, %v278
        %v281 = vadd.f32 %v275, %v278
        %v282 = vadd.f32 %v276, %v278
        %v283 = vmax.f32 %v279, 0.0
        %v284 = vmax.f32 %v280, 0.0
        %v285 = vmax.f32 %v281, 0.0
        %v286 = vmax.f32 %v282, 0.0
        %v287 = vadd.f32 %v283, %v283
        %v288 = vadd.f32 %v284, %v284
        %v289 = vadd.f32 %v285, %v285
        %v290 = vadd.f32 %v286, %v286
        %v291 = vadd.f32 %v287, %v283
        %v292 = vadd.f32 %v288, %v284
        %v293 = vadd.f32 %v289, %v285
        %v294 = vadd.f32 %v290, %v286
        %v295 = vadd.f32 %v291, %v283
        %v296 = vadd.f32 %v292, %v284
        %v297 = vadd.f32 %v293, %v285
        %v298 = vadd.f32 %v294, %v286
        %v299 = vmul.f32 %v295, 0.25
        %v300 = vmul.f32 %v296, 0.25
        %v301 = vmul.f32 %v297, 0.25
        %v302 = vmul.f32 %v298, 0.25
        %303 = vst [vmem:[%s221] sm:$0xff] %v299
        %304 = vst [vmem:[%s221 + $0x8] sm:$0xff] %v300
        %305 = vst [vmem:[%s221 + $0x10] sm:$0xff] %v301
        %306 = vst [vmem:[%s221 + $0x18] sm:$0xff] %v302
        %p307 = scmp.lt.s32.totalorder %s20, 1
        %s308 = scalar_select %p307, %s20, 1
        %p309 = scmp.lt.s32.totalorder %s21, 0
        %s310 = scalar_select %p309, %s21, 0
        %s311 = smul.addr %s310, 4
        %s312 = smul.addr %s308, 4
        %s313 = sadd.s32 %s311, %s312
        %s314 = smul.addr %s313, 8
        %s315 = scalar_lea.vmem %s3, %s314
        // Predicated region
        $region37: #{tta_pointwise_forward.1} parent=31 // pred_check
          %p316 = pneg %p118
        $region38: #{tta_pointwise_forward.1} parent=31 // pred_check_branch
          %318 = sbr.rel (%p316) target = $region40
        $region39: #{tta_pointwise_forward.1} parent=31 // pred_region
          _
        $region40: #{tta_pointwise_forward.1} parent=31 // pred_fallthru
          _
      $region32: #{tta_pointwise_forward.1} parent=5 // pred_fallthru
        _
      %p319 = scmp.le.s32.totalorder 2, %s11
      // Predicated region
      $region41: #{tta_pointwise_forward.1} parent=5 // pred_check
        %p320 = pneg %p319
      $region42: #{tta_pointwise_forward.1} parent=5 // pred_check_branch
        %322 = sbr.rel (%p320) target = $region44
      $region43: #{tta_pointwise_forward.1} parent=5 // pred_region
        %s323 = ssub.s32 %s11, 2
        // Predicated region
        $region45: #{tta_pointwise_forward.1} parent=43 // pred_check
          %p324 = pneg %p124
        $region46: #{tta_pointwise_forward.1} parent=43 // pred_check_branch
          %326 = sbr.rel (%p324) target = $region48
        $region47: #{tta_pointwise_forward.1} parent=43 // pred_region
          %p327 = scmp.lt.s32.totalorder %s22, 1
          %s328 = scalar_select %p327, %s22, 1
          %p329 = scmp.lt.s32.totalorder %s23, 0
          %s330 = scalar_select %p329, %s23, 0
          %s331 = smul.addr %s330, 4
          %s332 = smul.addr %s328, 4
          %s333 = sadd.s32 %s331, %s332
          %s334 = smul.addr %s333, 8
          %s335 = scalar_lea.vmem %s3, %s334
        $region48: #{tta_pointwise_forward.1} parent=43 // pred_fallthru
          _
      $region44: #{tta_pointwise_forward.1} parent=5 // pred_fallthru
        _
    $region6: #{tta_pointwise_forward.1} parent=1 // loop_footer
      %s15 = sadd.s32 1, %s11
    $region7: #{tta_pointwise_forward.1} parent=1 // loop_footer_branch
      %10 = sbr.rel target = $region3
    $region8: #{tta_pointwise_forward.1} parent=1 // loop_exit
      _
    %336 = vsyncpa [#allocation4], 1
    %s337 = scalar_lea.sflag [#allocation4], 1
    %338 = vsyncpa %s337, 1

</llo_original>
